<compile_context>
chip_gen: v6e
topology: v6e:2x2x1
jax: 0.10.0
libtpu: 0.0.40
codegen_flags: <defaults>
</compile_context>

<pallas_src>
import functools

import jax
import jax.numpy as jnp
from jax.experimental import pallas as pl
from jax.experimental.pallas import tpu as pltpu

_LANE = 128
_SUBLANE = 8
_NEG_PAD = -1.0e30   # exp()/softplus() of padded columns underflow to exactly 0


def _round_up(x, m):
    return (x + m - 1) // m * m


@functools.lru_cache(maxsize=1)
def _tpu_config():
    """Returns (is_v7x, num_tensorcores, vmem_limit_bytes)."""
    vmem_cap = None
    try:
        vmem_cap = int(pltpu.get_tpu_info().vmem_capacity_bytes)
    except Exception:
        pass
    kind = ""
    try:
        kind = jax.devices()[0].device_kind.lower()
    except Exception:
        pass
    is_v7x = ("v7" in kind) or ("7x" in kind) or (
        vmem_cap is not None and vmem_cap <= 64 * 1024 * 1024)
    if vmem_cap is None:
        vmem_cap = (64 if is_v7x else 128) * 1024 * 1024
    num_cores = 2 if is_v7x else 1
    # v7x: 64 MiB physical -> keep the scoped limit at <= 40 MiB.
    # v5e/v6e: 128 MiB physical -> 96 MiB lets the bigger tiles breathe.
    vmem_limit = min((40 if is_v7x else 96) * 1024 * 1024, vmem_cap * 3 // 4)
    return is_v7x, num_cores, vmem_limit


def _wbce_kernel(pos_ref, neg_ref, out_ref, acc_ref, *, inv_temperature):
    """Online-softmax weighted binary CE.

    pos_ref : (TB, 1)    positive scores
    neg_ref : (TB, TN)   one tile of negative scores
    out_ref : (TB, 1)    per-row loss, written on the last N step
    acc_ref : (TB, 128)  f32 scratch; lane 0 = running max, lane 1 = exp-sum,
                         lane 2 = softplus*exp-sum (consolidated accumulators)
    """
    tb = out_ref.shape[0]
    j = pl.program_id(1)

    @pl.when(j == 0)
    def _init():
        acc_ref[:, 0:1] = jnp.full((tb, 1), -jnp.inf, dtype=jnp.float32)
        acc_ref[:, 1:3] = jnp.zeros((tb, 2), dtype=jnp.float32)

    neg = neg_ref[...]
    if neg.dtype != jnp.float32:          # bf16 storage -> f32 math
        neg = neg.astype(jnp.float32)
    z = neg if inv_temperature == 1.0 else neg * inv_temperature

    # online-softmax statistics
    m_prev = acc_ref[:, 0:1]
    m_new = jnp.maximum(m_prev, jnp.max(z, axis=-1, keepdims=True))
    alpha = jnp.exp(m_prev - m_new)       # rescale previously accumulated sums
    e = jnp.exp(z - m_new)                # unnormalized softmax weights (EUP #1)

    if inv_temperature == 1.0:
        # 2-transcendental path: reuse e for softplus.
        #   softplus(x) = m + log(exp(-m) + exp(x - m))
        # Guards: clamp exp(-m) argument so it stays finite, clamp the log
        # argument against exact-zero underflow, and zero rows whose running
        # max is < -80 (true softplus there is < 2e-35, i.e. numerically 0).
        inv_em = jnp.exp(-jnp.maximum(m_new, -80.0))            # per-row
        sp = m_new + jnp.log(jnp.maximum(e + inv_em, 1e-38))    # EUP #2
        sp = jnp.where(m_new >= -80.0, sp, 0.0)
    else:
        # general temperature: z != neg, use the exact stable softplus(neg).
        sp = jnp.maximum(neg, 0.0) + jnp.log1p(jnp.exp(-jnp.abs(neg)))

    acc_ref[:, 1:2] = alpha * acc_ref[:, 1:2] + jnp.sum(e, axis=-1, keepdims=True)
    acc_ref[:, 2:3] = alpha * acc_ref[:, 2:3] + jnp.sum(sp * e, axis=-1, keepdims=True)
    acc_ref[:, 0:1] = m_new

    @pl.when(j == pl.num_programs(1) - 1)
    def _finalize():
        pos = pos_ref[...]
        if pos.dtype != jnp.float32:
            pos = pos.astype(jnp.float32)
        # -logsigmoid(p) == softplus(-p) = max(-p, 0) + log1p(exp(-|p|))
        neg_log_sig = jnp.maximum(-pos, 0.0) + jnp.log1p(jnp.exp(-jnp.abs(pos)))
        # exact reciprocal (per-row, negligible cost; approx would hurt accuracy)
        loss = neg_log_sig + acc_ref[:, 2:3] * pl.reciprocal(acc_ref[:, 1:2],
                                                             approx=False)
        out_ref[...] = loss.astype(out_ref.dtype)


def _choose_blocks(batch, n_neg, itemsize, *, is_v7x, num_cores):
    # negatives (lane) tile: whole row if small, otherwise 2048-wide tiles
    block_n = _round_up(min(n_neg, 2048), _LANE)
    n_pad = _round_up(n_neg, block_n)

    # Budget / row cap sized for the f32 compute temporaries, not just the DMA
    # buffers, and generation-aware (v7x has 64 MiB VMEM vs 128 MiB).
    neg_budget = (12 if is_v7x else 24) * 1024 * 1024
    row_cap = 256 if is_v7x else 512

    per_row_bytes = 2 * block_n * itemsize     # double-buffered neg input tile
    per_row_bytes += 4 * block_n * 4           # ~4 live f32 temporaries (z/e/sp/sp*e)
    per_row_bytes += 5 * _LANE * 4             # acc scratch + lane-padded pos/out bufs
    block_b = max(_SUBLANE, (neg_budget // per_row_bytes) // _SUBLANE * _SUBLANE)
    block_b = min(block_b, row_cap)

    b_pad = _round_up(batch, _SUBLANE)
    block_b = min(block_b, b_pad)
    # Only force >= 2 batch blocks on 2-TensorCore chips (v7x); on single-TC
    # v5e/v6e a split just shrinks tiles and adds grid-step overhead.
    if num_cores >= 2 and b_pad // block_b < 2 and b_pad >= 2 * _SUBLANE:
        block_b = _round_up((b_pad + 1) // 2, _SUBLANE)
    b_pad = _round_up(batch, block_b)
    return block_b, block_n, b_pad, n_pad


def weighted_binary_ce_loss(pos_score, neg_score, *, temperature=1.0):
    """pos_score: (B, 1) or (B,); neg_score: (B, N)  ->  loss: (B,) float32."""
    batch, n_neg = neg_score.shape
    pos2d = jnp.reshape(pos_score, (batch, 1))

    is_v7x, num_cores, vmem_limit = _tpu_config()
    block_b, block_n, b_pad, n_pad = _choose_blocks(
        batch, n_neg, jnp.dtype(neg_score.dtype).itemsize,
        is_v7x=is_v7x, num_cores=num_cores)

    # pad only when the chosen blocks do not evenly divide the inputs
    if (b_pad, n_pad) != (batch, n_neg):
        neg_score = jnp.pad(
            neg_score, ((0, b_pad - batch), (0, n_pad - n_neg)),
            constant_values=_NEG_PAD)
    if b_pad != batch:
        pos2d = jnp.pad(pos2d, ((0, b_pad - batch), (0, 0)))

    kernel = functools.partial(_wbce_kernel,
                               inv_temperature=1.0 / float(temperature))

    out = pl.pallas_call(
        kernel,
        out_shape=jax.ShapeDtypeStruct((b_pad, 1), jnp.float32),
        grid_spec=pltpu.PrefetchScalarGridSpec(
            num_scalar_prefetch=0,
            grid=(b_pad // block_b, n_pad // block_n),
            in_specs=[
                pl.BlockSpec((block_b, 1), lambda i, j: (i, 0)),
                pl.BlockSpec((block_b, block_n), lambda i, j: (i, j)),
            ],
            out_specs=pl.BlockSpec((block_b, 1), lambda i, j: (i, 0)),
            scratch_shapes=[pltpu.VMEM((block_b, _LANE), jnp.float32)],
        ),
        compiler_params=pltpu.CompilerParams(
            dimension_semantics=("parallel", "arbitrary"),
            vmem_limit_bytes=vmem_limit,
        ),
    )(pos2d, neg_score)

    return out[:batch, 0]


def _reference(pos_score, neg_score, temperature=1.0):
    weight = jax.nn.softmax(neg_score / temperature, axis=-1)
    return -jax.nn.log_sigmoid(jnp.squeeze(pos_score)) + jnp.sum(
        jax.nn.softplus(neg_score) * weight, axis=-1)


if __name__ == "__main__":
    key = jax.random.PRNGKey(0)
    k1, k2, k3, k4 = jax.random.split(key, 4)

    # small, aligned case; temperature == 1 exercises the 2-transcendental path
    B, N = 16, 128
    pos = jax.random.normal(k1, (B, 1), dtype=jnp.float32)
    neg = jax.random.normal(k2, (B, N), dtype=jnp.float32)
    loss = jax.block_until_ready(weighted_binary_ce_loss(pos, neg, temperature=1.0))
    ref = _reference(pos, neg, temperature=1.0)
    assert loss.shape == (B,)
    assert jnp.allclose(loss, ref, atol=1e-5, rtol=1e-5), (loss, ref)

    # awkward shapes + non-unit temperature exercise padding and the general
    # (exact softplus) path of the N-tiled online-softmax accumulation
    B2, N2 = 10, 200
    pos2 = jax.random.normal(k3, (B2, 1), dtype=jnp.float32)
    neg2 = 3.0 * jax.random.normal(k4, (B2, N2), dtype=jnp.float32)
    loss2 = jax.block_until_ready(weighted_binary_ce_loss(pos2, neg2, temperature=0.5))
    ref2 = _reference(pos2, neg2, temperature=0.5)
    assert loss2.shape == (B2,)
    assert jnp.allclose(loss2, ref2, atol=1e-5, rtol=1e-5), (loss2, ref2)

    print("KERNEL_OK")
</pallas_src>

<mosaic_0001>
module attributes {stable_mosaic.version = 11 : i64} {
  func.func @_wbce_kernel(%arg0: i32, %arg1: i32, %arg2: memref<16x1xf32, #tpu.memory_space<vmem>>, %arg3: memref<16x128xf32, #tpu.memory_space<vmem>>, %arg4: memref<16x1xf32, #tpu.memory_space<vmem>>, %arg5: memref<16x128xf32, #tpu.memory_space<vmem>>) attributes {dimension_semantics = [#tpu.dimension_semantics<parallel>, #tpu.dimension_semantics<arbitrary>], iteration_bounds = array<i64: 1, 1>, scalar_prefetch = 0 : i64, scratch_operands = 1 : i64, tpu.core_type = #tpu.core_type<tc>, window_params = [{transform_indices = @transform_0, window_bounds = array<i64: 16, 1>}, {transform_indices = @transform_1, window_bounds = array<i64: 16, 128>}, {transform_indices = @transform_2, window_bounds = array<i64: 16, 1>}]} {
    %c0_i32 = arith.constant 0 : i32
    %0 = arith.cmpi eq, %arg1, %c0_i32 : i32
    %1 = arith.extui %0 : i1 to i32
    %c0_i32_0 = arith.constant 0 : i32
    %2 = arith.cmpi ne, %1, %c0_i32_0 : i32
    scf.if %2 {
      %cst_21 = arith.constant 0xFF800000 : f32
      %48 = vector.broadcast %cst_21 : f32 to vector<16x1xf32>
      %c0_22 = arith.constant 0 : index
      %c0_23 = arith.constant 0 : index
      %49 = vector.load %arg5[%c0_22, %c0_23] : memref<16x128xf32, #tpu.memory_space<vmem>>, vector<16x1xf32>
      tpu.vector_store %arg5[%c0_22, %c0_23], %48 {strides = array<i32>} : memref<16x128xf32, #tpu.memory_space<vmem>>, vector<16x1xf32>,
      %cst_24 = arith.constant 0.000000e+00 : f32
      %50 = vector.broadcast %cst_24 : f32 to vector<16x2xf32>
      %c0_25 = arith.constant 0 : index
      %c1_26 = arith.constant 1 : index
      %51 = vector.load %arg5[%c0_25, %c1_26] : memref<16x128xf32, #tpu.memory_space<vmem>>, vector<16x2xf32>
      tpu.vector_store %arg5[%c0_25, %c1_26], %50 {strides = array<i32>} : memref<16x128xf32, #tpu.memory_space<vmem>>, vector<16x2xf32>,
    } else {
    }
    %c0 = arith.constant 0 : index
    %c0_1 = arith.constant 0 : index
    %3 = vector.load %arg3[%c0, %c0_1] : memref<16x128xf32, #tpu.memory_space<vmem>>, vector<16x128xf32>
    %c0_2 = arith.constant 0 : index
    %c0_3 = arith.constant 0 : index
    %4 = vector.load %arg5[%c0_2, %c0_3] : memref<16x128xf32, #tpu.memory_space<vmem>>, vector<16x1xf32>
    %cst = arith.constant dense<0xFF800000> : vector<16xf32>
    %5 = vector.multi_reduction <maximumf>, %3, %cst [1] : vector<16x128xf32> to vector<16xf32>
    %6 = vector.shape_cast %5 : vector<16xf32> to vector<16x1xf32>
    %7 = arith.maximumf %4, %6 : vector<16x1xf32>
    %8 = arith.subf %4, %7 : vector<16x1xf32>
    %9 = math.exp %8 : vector<16x1xf32>
    %10 = vector.broadcast %7 : vector<16x1xf32> to vector<16x128xf32>
    %11 = arith.subf %3, %10 : vector<16x128xf32>
    %12 = math.exp %11 : vector<16x128xf32>
    %cst_4 = arith.constant -8.000000e+01 : f32
    %13 = vector.broadcast %cst_4 : f32 to vector<16x1xf32>
    %14 = arith.maximumf %7, %13 : vector<16x1xf32>
    %cst_5 = arith.constant 0.000000e+00 : f32
    %15 = vector.broadcast %cst_5 : f32 to vector<16x1xf32>
    %16 = arith.subf %15, %14 : vector<16x1xf32>
    %17 = math.exp %16 : vector<16x1xf32>
    %18 = vector.broadcast %17 : vector<16x1xf32> to vector<16x128xf32>
    %19 = arith.addf %12, %18 : vector<16x128xf32>
    %cst_6 = arith.constant 9.99999935E-39 : f32
    %20 = vector.broadcast %cst_6 : f32 to vector<16x128xf32>
    %21 = arith.maximumf %19, %20 : vector<16x128xf32>
    %22 = math.log %21 : vector<16x128xf32>
    %23 = vector.broadcast %7 : vector<16x1xf32> to vector<16x128xf32>
    %24 = arith.addf %23, %22 : vector<16x128xf32>
    %cst_7 = arith.constant -8.000000e+01 : f32
    %25 = vector.broadcast %cst_7 : f32 to vector<16x1xf32>
    %26 = arith.cmpf oge, %7, %25 : vector<16x1xf32>
    %cst_8 = arith.constant 0.000000e+00 : f32
    %27 = vector.shape_cast %26 : vector<16x1xi1> to vector<16x1xi1>
    %28 = vector.broadcast %27 : vector<16x1xi1> to vector<16x128xi1>
    %29 = vector.broadcast %cst_8 : f32 to vector<16x128xf32>
    %30 = arith.select %28, %24, %29 : vector<16x128xi1>, vector<16x128xf32>
    %c0_9 = arith.constant 0 : index
    %c1 = arith.constant 1 : index
    %31 = vector.load %arg5[%c0_9, %c1] : memref<16x128xf32, #tpu.memory_space<vmem>>, vector<16x1xf32>
    %32 = arith.mulf %9, %31 : vector<16x1xf32>
    %cst_10 = arith.constant dense<0.000000e+00> : vector<16xf32>
    %33 = vector.multi_reduction <add>, %12, %cst_10 [1] : vector<16x128xf32> to vector<16xf32>
    %34 = vector.shape_cast %33 : vector<16xf32> to vector<16x1xf32>
    %35 = arith.addf %32, %34 : vector<16x1xf32>
    %c0_11 = arith.constant 0 : index
    %c1_12 = arith.constant 1 : index
    %36 = vector.load %arg5[%c0_11, %c1_12] : memref<16x128xf32, #tpu.memory_space<vmem>>, vector<16x1xf32>
    tpu.vector_store %arg5[%c0_11, %c1_12], %35 {strides = array<i32>} : memref<16x128xf32, #tpu.memory_space<vmem>>, vector<16x1xf32>,
    %c0_13 = arith.constant 0 : index
    %c2 = arith.constant 2 : index
    %37 = vector.load %arg5[%c0_13, %c2] : memref<16x128xf32, #tpu.memory_space<vmem>>, vector<16x1xf32>
    %38 = arith.mulf %9, %37 : vector<16x1xf32>
    %39 = arith.mulf %30, %12 : vector<16x128xf32>
    %cst_14 = arith.constant dense<0.000000e+00> : vector<16xf32>
    %40 = vector.multi_reduction <add>, %39, %cst_14 [1] : vector<16x128xf32> to vector<16xf32>
    %41 = vector.shape_cast %40 : vector<16xf32> to vector<16x1xf32>
    %42 = arith.addf %38, %41 : vector<16x1xf32>
    %c0_15 = arith.constant 0 : index
    %c2_16 = arith.constant 2 : index
    %43 = vector.load %arg5[%c0_15, %c2_16] : memref<16x128xf32, #tpu.memory_space<vmem>>, vector<16x1xf32>
    tpu.vector_store %arg5[%c0_15, %c2_16], %42 {strides = array<i32>} : memref<16x128xf32, #tpu.memory_space<vmem>>, vector<16x1xf32>,
    %c0_17 = arith.constant 0 : index
    %c0_18 = arith.constant 0 : index
    %44 = vector.load %arg5[%c0_17, %c0_18] : memref<16x128xf32, #tpu.memory_space<vmem>>, vector<16x1xf32>
    tpu.vector_store %arg5[%c0_17, %c0_18], %7 {strides = array<i32>} : memref<16x128xf32, #tpu.memory_space<vmem>>, vector<16x1xf32>,
    %c0_i32_19 = arith.constant 0 : i32
    %45 = arith.cmpi eq, %arg1, %c0_i32_19 : i32
    %46 = arith.extui %45 : i1 to i32
    %c0_i32_20 = arith.constant 0 : i32
    %47 = arith.cmpi ne, %46, %c0_i32_20 : i32
    scf.if %47 {
      %c0_21 = arith.constant 0 : index
      %c0_22 = arith.constant 0 : index
      %48 = vector.load %arg2[%c0_21, %c0_22] : memref<16x1xf32, #tpu.memory_space<vmem>>, vector<16x1xf32>
      %cst_23 = arith.constant 0.000000e+00 : f32
      %49 = vector.broadcast %cst_23 : f32 to vector<16x1xf32>
      %50 = arith.subf %49, %48 : vector<16x1xf32>
      %cst_24 = arith.constant 0.000000e+00 : f32
      %51 = vector.broadcast %cst_24 : f32 to vector<16x1xf32>
      %52 = arith.maximumf %50, %51 : vector<16x1xf32>
      %53 = math.absf %48 : vector<16x1xf32>
      %cst_25 = arith.constant 0.000000e+00 : f32
      %54 = vector.broadcast %cst_25 : f32 to vector<16x1xf32>
      %55 = arith.subf %54, %53 : vector<16x1xf32>
      %56 = math.exp %55 : vector<16x1xf32>
      %57 = math.log1p %56 : vector<16x1xf32>
      %58 = arith.addf %52, %57 : vector<16x1xf32>
      %c0_26 = arith.constant 0 : index
      %c2_27 = arith.constant 2 : index
      %59 = vector.load %arg5[%c0_26, %c2_27] : memref<16x128xf32, #tpu.memory_space<vmem>>, vector<16x1xf32>
      %c0_28 = arith.constant 0 : index
      %c1_29 = arith.constant 1 : index
      %60 = vector.load %arg5[%c0_28, %c1_29] : memref<16x128xf32, #tpu.memory_space<vmem>>, vector<16x1xf32>
      %61 = tpu.reciprocal %60 : vector<16x1xf32> -> vector<16x1xf32>
      %62 = arith.mulf %59, %61 : vector<16x1xf32>
      %63 = arith.addf %58, %62 : vector<16x1xf32>
      %c0_30 = arith.constant 0 : index
      %c0_31 = arith.constant 0 : index
      %64 = vector.load %arg4[%c0_30, %c0_31] : memref<16x1xf32, #tpu.memory_space<vmem>>, vector<16x1xf32>
      tpu.vector_store %arg4[%c0_30, %c0_31], %63 {strides = array<i32>} : memref<16x1xf32, #tpu.memory_space<vmem>>, vector<16x1xf32>,
    } else {
    }
    return
  }
  func.func @transform_0(%arg0: i32, %arg1: i32) -> (i32, i32) {
    %c0_i32 = arith.constant 0 : i32
    %c0_i32_0 = arith.constant 0 : i32
    return %arg0, %c0_i32 : i32, i32
  }
  func.func @transform_1(%arg0: i32, %arg1: i32) -> (i32, i32) {
    %c0_i32 = arith.constant 0 : i32
    return %arg0, %arg1 : i32, i32
  }
  func.func @transform_2(%arg0: i32, %arg1: i32) -> (i32, i32) {
    %c0_i32 = arith.constant 0 : i32
    %c0_i32_0 = arith.constant 0 : i32
    return %arg0, %c0_i32 : i32, i32
  }
}

</mosaic_0001>

<llo_original>
// kernel: tpu_custom_call.1
$region0: #{tpu_custom_call.1}
  #allocation0 [shape = 'u32[]', space=smem, size = 0x4, offset = 0x4, fixed_abs, tag = 'smem constant byte address 0x4 - core index']
  #allocation1 [shape = 'u32[144,128]{1,0:T(1,128)}', space=vmem, size = 0x12000, scoped, tag = 'internal scratch']
  #allocation2 [shape = 'f32[16,128]{1,0:T(8,128)}', space=vmem, size = 0x2000, scoped, tag = 'scratch operand']
  %s0 = inlined_call_operand.vmem [shape: f32[16,1], index: 0, kind: input, shape index: {}]
  %s1 = inlined_call_operand.vmem [shape: f32[16,128], index: 1, kind: input, shape index: {}]
  %s2 = inlined_call_operand.vmem [shape: f32[16,1], index: 2, kind: output, shape index: {}]
  %s3 = sld [smem:[#allocation0]]
  $region26: #{tpu_custom_call.1} parent=0
    _
  %s5 = ssub.s32 1, %s3
  %s6 = scalar_select 0, %s5, %s3
  // Predicated region
  $region2: #{tpu_custom_call.1} parent=0 // pred_check
    _
  $region3: #{tpu_custom_call.1} parent=0 // pred_check_branch
    %8 = sbr.rel (0) target = $region5
  $region4: #{tpu_custom_call.1} parent=0 // pred_region
    _
  $region5: #{tpu_custom_call.1} parent=0 // pred_fallthru
    _
  // Predicated region
  $region6: #{tpu_custom_call.1} parent=0 // pred_check
    _
  $region7: #{tpu_custom_call.1} parent=0 // pred_check_branch
    %10 = sbr.rel (0) target = $region9
  $region8: #{tpu_custom_call.1} parent=0 // pred_region
    _
  $region9: #{tpu_custom_call.1} parent=0 // pred_fallthru
    _
  %p11 = scmp.eq.s32.totalorder 0, 0
  // Predicated region
  $region10: #{tpu_custom_call.1} parent=0 // pred_check
    %p12 = pneg %p11
  $region11: #{tpu_custom_call.1} parent=0 // pred_check_branch
    %14 = sbr.rel (%p12) target = $region13
  $region12: #{tpu_custom_call.1} parent=0 // pred_region
    %vm15 = vcmask 7168
    %16 = vst.msk [vmem:[#allocation2] sm:$0xff] %vm15, -inf
    %17 = vst.msk [vmem:[#allocation2 + $0x8] sm:$0xff] %vm15, -inf
    %vm18 = vcmask 23560
    %19 = vst.msk [vmem:[#allocation2] sm:$0xff] %vm18, 0.0
    %20 = vst.msk [vmem:[#allocation2 + $0x8] sm:$0xff] %vm18, 0.0
  $region13: #{tpu_custom_call.1} parent=0 // pred_fallthru
    _
  %v21 = vld [vmem:[%s1] sm:$0xff]
  %v22 = vld [vmem:[%s1 + $0x8] sm:$0xff]
  %v23 = vld [vmem:[#allocation2] sm:$0xff]
  %v24 = vld [vmem:[#allocation2 + $0x8] sm:$0xff]
  %25 = vmax.xlane.f32.xlu0 %v21
  %v26 = vpop.xlane.xlu0 %25
  %27 = vmax.xlane.f32.xlu0 %v22
  %v28 = vpop.xlane.xlu0 %27
  %v29 = vmax.f32 %v23, %v26
  %v30 = vmax.f32 %v24, %v28
  %v31 = vsub.f32 %v23, %v29
  %v32 = vsub.f32 %v24, %v30
  %v33 = vmul.f32 %v31, 1.442695
  %v34 = vpow.pop %v33
  %v35 = vmul.f32 %v32, 1.442695
  %v36 = vpow.pop %v35
  %38 = vset.pattern.permute.xlu0 0
  %39 = vperm.xlu0 %38, %v29
  %v40 = vpop.permute.xlu0 %39
  %43 = vset.pattern.permute.xlu0 0
  %44 = vperm.xlu0 %43, %v30
  %v45 = vpop.permute.xlu0 %44
  %v47 = vsub.f32 %v21, %v40
  %v48 = vsub.f32 %v22, %v45
  %v49 = vmul.f32 %v47, 1.442695
  %v50 = vpow.pop %v49
  %v51 = vmul.f32 %v48, 1.442695
  %v52 = vpow.pop %v51
  %v53 = vmax.f32 %v29, -80.0
  %v54 = vmax.f32 %v30, -80.0
  %v55 = vsub.f32 0.0, %v53
  %v56 = vsub.f32 0.0, %v54
  %v57 = vmul.f32 %v55, 1.442695
  %v58 = vpow.pop %v57
  %v59 = vmul.f32 %v56, 1.442695
  %v60 = vpow.pop %v59
  %62 = vset.pattern.permute.xlu0 0
  %63 = vperm.xlu0 %62, %v58
  %v64 = vpop.permute.xlu0 %63
  %67 = vset.pattern.permute.xlu0 0
  %68 = vperm.xlu0 %67, %v60
  %v69 = vpop.permute.xlu0 %68
  %v71 = vadd.f32 %v50, %v64
  %v72 = vadd.f32 %v52, %v69
  %v73 = vmax.f32 %v71, 1e-38
  %v74 = vmax.f32 %v72, 1e-38
  %v75 = vlog2.pop %v73
  %v76 = vmul.f32 %v75, 0.6931472
  %v77 = vlog2.pop %v74
  %v78 = vmul.f32 %v77, 0.6931472
  %v79 = vadd.f32 %v40, %v76
  %v80 = vadd.f32 %v45, %v78
  %vm81 = vcmp.ge.f32.partialorder %v29, -80.0
  %vm82 = vcmp.ge.f32.partialorder %v30, -80.0
  %v83 = vsel %vm81, 1, 0
  %v84 = vsel %vm82, 1, 0
  %85 = vset.pattern.permute.xlu0 0
  %86 = vperm.xlu0 %85, %v83
  %v87 = vpop.permute.xlu0 %86
  %88 = vset.pattern.permute.xlu0 0
  %89 = vperm.xlu0 %88, %v84
  %v90 = vpop.permute.xlu0 %89
  %vm91 = vcmp.eq.s32.totalorder %v87, 1
  %vm92 = vcmp.eq.s32.totalorder %v90, 1
  %v93 = vsel %vm91, %v79, 0.0
  %v94 = vsel %vm92, %v80, 0.0
  %97 = vrot.lane.b32.xlu0 %v23, 127
  %v98 = vpop.permute.xlu0 %97
  %99 = vrot.lane.b32.xlu0 %v24, 127
  %v100 = vpop.permute.xlu0 %99
  %v103 = vmul.f32 %v34, %v98
  %v104 = vmul.f32 %v36, %v100
  %105 = vadd.xlane.f32.xlu0 %v50
  %v106 = vpop.xlane.xlu0 %105
  %107 = vadd.xlane.f32.xlu0 %v52
  %v108 = vpop.xlane.xlu0 %107
  %v109 = vadd.f32 %v103, %v106
  %v110 = vadd.f32 %v104, %v108
  %113 = vrot.lane.b32.xlu0 %v109, 1
  %v114 = vpop.permute.xlu0 %113
  %115 = vrot.lane.b32.xlu0 %v110, 1
  %v116 = vpop.permute.xlu0 %115
  %vm119 = vcmask 15368
  %120 = vst.msk [vmem:[#allocation2] sm:$0xff] %vm119, %v114
  %121 = vst.msk [vmem:[#allocation2 + $0x8] sm:$0xff] %vm119, %v116
  %v122 = vld [vmem:[#allocation2] sm:$0xff]
  %v123 = vld [vmem:[#allocation2 + $0x8] sm:$0xff]
  %126 = vrot.lane.b32.xlu0 %v122, 126
  %v127 = vpop.permute.xlu0 %126
  %128 = vrot.lane.b32.xlu0 %v123, 126
  %v129 = vpop.permute.xlu0 %128
  %v132 = vmul.f32 %v34, %v127
  %v133 = vmul.f32 %v36, %v129
  %v134 = vmul.f32 %v93, %v50
  %v135 = vmul.f32 %v94, %v52
  %136 = vadd.xlane.f32.xlu0 %v134
  %v137 = vpop.xlane.xlu0 %136
  %138 = vadd.xlane.f32.xlu0 %v135
  %v139 = vpop.xlane.xlu0 %138
  %v140 = vadd.f32 %v132, %v137
  %v141 = vadd.f32 %v133, %v139
  %144 = vrot.lane.b32.xlu0 %v140, 2
  %v145 = vpop.permute.xlu0 %144
  %146 = vrot.lane.b32.xlu0 %v141, 2
  %v147 = vpop.permute.xlu0 %146
  %vm150 = vcmask 23568
  %151 = vst.msk [vmem:[#allocation2] sm:$0xff] %vm150, %v145
  %152 = vst.msk [vmem:[#allocation2 + $0x8] sm:$0xff] %vm150, %v147
  %vm153 = vcmask 7168
  %154 = vst.msk [vmem:[#allocation2] sm:$0xff] %vm153, %v29
  %155 = vst.msk [vmem:[#allocation2 + $0x8] sm:$0xff] %vm153, %v30
  // Predicated region
  $region14: #{tpu_custom_call.1} parent=0 // pred_check
    %p156 = pneg %p11
  $region15: #{tpu_custom_call.1} parent=0 // pred_check_branch
    %158 = sbr.rel (%p156) target = $region17
  $region16: #{tpu_custom_call.1} parent=0 // pred_region
    %v159 = vld [vmem:[%s0] sm:$0xff]
    %v160 = vld [vmem:[%s0 + $0x8] sm:$0xff]
    %v161 = vsub.f32 0.0, %v159
    %v162 = vsub.f32 0.0, %v160
    %v163 = vmax.f32 %v161, 0.0
    %v164 = vmax.f32 %v162, 0.0
    %v165 = vand.u32 2147483647, %v159
    %v166 = vand.u32 2147483647, %v160
    %v167 = vsub.f32 0.0, %v165
    %v168 = vsub.f32 0.0, %v166
    %v169 = vmul.f32 %v167, 1.442695
    %v170 = vpow.pop %v169
    %v171 = vmul.f32 %v168, 1.442695
    %v172 = vpow.pop %v171
    %v173 = vadd.f32 %v170, 1.0
    %v174 = vlog2.pop %v173
    %v175 = vmul.f32 %v174, 0.6931472
    %v176 = vmul.f32 -0.5, %v170
    %v177 = vadd.f32 %v176, 1.0
    %v178 = vmul.f32 %v177, %v170
    %v179 = vand.u32 2147483647, %v170
    %vm180 = vcmp.lt.f32.partialorder %v179, 0.0004427343
    %v181 = vsel %vm180, %v178, %v175
    %v182 = vadd.f32 %v172, 1.0
    %v183 = vlog2.pop %v182
    %v184 = vmul.f32 %v183, 0.6931472
    %v185 = vmul.f32 -0.5, %v172
    %v186 = vadd.f32 %v185, 1.0
    %v187 = vmul.f32 %v186, %v172
    %v188 = vand.u32 2147483647, %v172
    %vm189 = vcmp.lt.f32.partialorder %v188, 0.0004427343
    %v190 = vsel %vm189, %v187, %v184
    %v191 = vadd.f32 %v163, %v181
    %v192 = vadd.f32 %v164, %v190
    %v193 = vld [vmem:[#allocation2] sm:$0xff]
    %v194 = vld [vmem:[#allocation2 + $0x8] sm:$0xff]
    %v195 = vrcp.pop %v193
    %v196 = vrcp.pop %v194
    %199 = vrot.lane.b32.xlu0 %v195, 1
    %v200 = vpop.permute.xlu0 %199
    %201 = vrot.lane.b32.xlu0 %v196, 1
    %v202 = vpop.permute.xlu0 %201
    %v205 = vmul.f32 %v193, %v200
    %v206 = vmul.f32 %v194, %v202
    %209 = vrot.lane.b32.xlu0 %v205, 126
    %v210 = vpop.permute.xlu0 %209
    %211 = vrot.lane.b32.xlu0 %v206, 126
    %v212 = vpop.permute.xlu0 %211
    %v215 = vadd.f32 %v191, %v210
    %v216 = vadd.f32 %v192, %v212
    %217 = vst.msk [vmem:[%s2] sm:$0xff] %vm153, %v215
    %218 = vst.msk [vmem:[%s2 + $0x8] sm:$0xff] %vm153, %v216
  $region17: #{tpu_custom_call.1} parent=0 // pred_fallthru
    _
  // Predicated region
  $region18: #{tpu_custom_call.1} parent=0 // pred_check
    _
  $region19: #{tpu_custom_call.1} parent=0 // pred_check_branch
    %220 = sbr.rel (0) target = $region21
  $region20: #{tpu_custom_call.1} parent=0 // pred_region
    _
  $region21: #{tpu_custom_call.1} parent=0 // pred_fallthru
    _
  // Predicated region
  $region22: #{tpu_custom_call.1} parent=0 // pred_check
    _
  $region23: #{tpu_custom_call.1} parent=0 // pred_check_branch
    %222 = sbr.rel (0) target = $region25
  $region24: #{tpu_custom_call.1} parent=0 // pred_region
    _
  $region25: #{tpu_custom_call.1} parent=0 // pred_fallthru
    _

</llo_original>
